<compile_context>
chip_gen: v6e
topology: v6e:2x2x1
jax: 0.10.0
libtpu: 0.0.40
codegen_flags: <defaults>
</compile_context>

<pallas_src>
import functools

import jax
import jax.numpy as jnp
from jax import lax
from jax.experimental import pallas as pl
from jax.experimental.pallas import tpu as pltpu


def _kernel(ids_ref, wt_ref, o_ref, *, multi_k):
    """ids_ref: [TR, Fx] int32 (fused-table column ids, offsets pre-added).
       wt_ref : [TK, Hp] bf16 fused embedding-table tile.
       o_ref  : [TR, Hp] f32 output (accumulator when multi_k)."""
    TK = wt_ref.shape[0]

    if multi_k:
        k = pl.program_id(1)

        @pl.when(k == 0)
        def _():
            o_ref[...] = jnp.zeros_like(o_ref)

        col0 = k * TK
    else:
        col0 = 0

    ids = ids_ref[...]                       # [TR, Fx]
    TR, Fx = ids.shape

    # Shift ids into tile-local coordinates and compare against a k-invariant
    # iota (saves a full [TR, TK] add per step vs building col0 + iota).
    ids_loc = ids - col0
    cols = lax.broadcasted_iota(jnp.int32, (TR, TK), 1)

    # Multi-hot counts accumulated as int32; a single cast to the MXU dtype.
    hot = (ids_loc[:, 0:1] == cols).astype(jnp.int32)
    for f in range(1, Fx):                   # Fx is small & static -> unrolled
        hot = hot + (ids_loc[:, f:f + 1] == cols).astype(jnp.int32)
    hot = hot.astype(wt_ref.dtype)

    # Single fused MXU pass (bf16 x bf16 -> f32 accumulate).
    partial = jnp.dot(hot, wt_ref[...], preferred_element_type=jnp.float32)
    if multi_k:
        o_ref[...] += partial
    else:
        o_ref[...] = partial
    # TODO(synk): dynamic pl.when gating of the per-column compares (only run
    # node / in-degree / out-degree compares for vocab tiles that overlap
    # their column ranges) would further cut VALU work in the tiled fallback;
    # it is moot on the primary (resident, single-tile) path.


def encoder_node_feature(x_ids, in_degree, out_degree,
                         w_node, w_in, w_out,
                         *, row_tile=512, max_vocab_tile=2048,
                         table_dtype=jnp.bfloat16):
    B, N, F = x_ids.shape
    Tn, H = w_node.shape
    Di = w_in.shape[0]
    Do = w_out.shape[0]
    Fx = F + 2
    R = B * N

    def rup(a, b):
        return ((a + b - 1) // b) * b

    # ---- fused vocab axis ---------------------------------------------------
    Vf = Tn + Di + Do
    Hp = rup(H, 128)                      # lane-dense hidden dim
    Vp_full = rup(Vf, 128)

    # Table residency: single vocab tile whenever the bf16 fused table fits a
    # conservative VMEM budget (leave room for row tiles, output, temporaries
    # and v7x's 64 MiB/TC VMEM).  Otherwise fall back to vocab tiling.
    table_budget_bytes = 16 * 1024 * 1024
    itemsize = jnp.dtype(table_dtype).itemsize
    if Vp_full * Hp * itemsize <= table_budget_bytes:
        vocab_tile = Vp_full
    else:
        vocab_tile = rup(min(max_vocab_tile, Vp_full), 128)
    Vp = rup(Vf, vocab_tile)
    num_k = Vp // vocab_tile
    multi_k = num_k > 1

    # ---- row tiling ---------------------------------------------------------
    # >= 2 row tiles whenever possible so ("parallel", ...) can shard rows
    # across v7x's two TensorCores.
    if R > 8:
        row_tile = min(row_tile, rup(-(-R // 2), 8))
    # Bound the [row_tile, vocab_tile] one-hot temporaries (VMEM headroom).
    max_hot_elems = 2 * 1024 * 1024
    rt_cap = max(8, ((max_hot_elems // vocab_tile) // 8) * 8)
    row_tile = min(row_tile, rt_cap)
    row_tile = rup(min(row_tile, rup(R, 8)), 8)
    Rp = rup(R, row_tile)

    # ---- host-side packing --------------------------------------------------
    # Degrees become extra id columns with fused-table offsets pre-added.
    ids = jnp.concatenate(
        [x_ids.reshape(R, F).astype(jnp.int32),
         in_degree.reshape(R, 1).astype(jnp.int32) + Tn,
         out_degree.reshape(R, 1).astype(jnp.int32) + Tn + Di],
        axis=1)                                                 # [R, F+2]
    if Rp != R:
        # Pad with -1 so padded rows match no fused column (zero output rows).
        ids = jnp.pad(ids, ((0, Rp - R), (0, 0)), constant_values=-1)

    # Fused table [w_node; w_in; w_out], zero-padded, cast to bf16 (MXU-native).
    wt = jnp.concatenate([w_node, w_in, w_out], axis=0).astype(jnp.float32)
    wt = jnp.pad(wt, ((0, Vp - Vf), (0, Hp - H))).astype(table_dtype)

    # ---- grid / specs -------------------------------------------------------
    if multi_k:
        grid = (Rp // row_tile, num_k)
        in_specs = [
            pl.BlockSpec((row_tile, Fx), lambda i, k: (i, 0)),
            pl.BlockSpec((vocab_tile, Hp), lambda i, k: (k, 0)),
        ]
        out_spec = pl.BlockSpec((row_tile, Hp), lambda i, k: (i, 0))
        dim_sem = ("parallel", "arbitrary")
    else:
        grid = (Rp // row_tile,)
        in_specs = [
            pl.BlockSpec((row_tile, Fx), lambda i: (i, 0)),
            # Constant block index -> the fused table is DMA'd once and stays
            # resident in VMEM for the whole kernel.
            pl.BlockSpec((vocab_tile, Hp), lambda i: (0, 0)),
        ]
        out_spec = pl.BlockSpec((row_tile, Hp), lambda i: (i, 0))
        dim_sem = ("parallel",)

    cost = pl.CostEstimate(
        flops=2 * Rp * Vp * Hp,
        transcendentals=0,
        bytes_accessed=(Rp * Fx * 4) + (Vp * Hp * itemsize) + (Rp * Hp * 4))

    # Keep the limit comfortably under v7x's 64 MiB physical VMEM.
    vmem_limit = min(
        48 * 1024 * 1024,
        2 * (vocab_tile * Hp * itemsize + row_tile * Fx * 4
             + row_tile * Hp * 4)
        + row_tile * vocab_tile * 6 + (16 << 20))

    kernel = functools.partial(_kernel, multi_k=multi_k)

    out = pl.pallas_call(
        kernel,
        out_shape=jax.ShapeDtypeStruct((Rp, Hp), jnp.float32),
        grid_spec=pltpu.PrefetchScalarGridSpec(
            num_scalar_prefetch=0,
            grid=grid,
            in_specs=in_specs,
            out_specs=out_spec,
        ),
        compiler_params=pltpu.CompilerParams(
            dimension_semantics=dim_sem,
            vmem_limit_bytes=int(vmem_limit)),
        cost_estimate=cost,
    )(ids, wt)

    return out[:R, :H].reshape(B, N, H)


def xavier_normal(key, shape):
    # torch xavier_normal_ on a 2-D weight [d0, d1]: fan_out=d0, fan_in=d1
    fan_out, fan_in = shape
    std = (2.0 / (fan_in + fan_out)) ** 0.5
    return std * jax.random.normal(key, shape, jnp.float32)


# TODO(synk): the nn.Linear branch (num_node_type < 0) is not exercised here;
# it is a plain dense matmul and would reuse the same MXU path.
# TODO(synk): for very large fused vocabularies (Vf >> 8k) a gather-style
# kernel (resident table + dynamic row indexing) scales better than the
# multi-hot matmul; not needed for Graphormer-sized vocabularies.

if __name__ == "__main__":
    # Small, module-consistent shapes.
    B, N, F, H = 2, 8, 3, 32
    num_node_type, num_in_degree, num_out_degree = 16, 8, 8

    key = jax.random.PRNGKey(0)
    k1, k2, k3, k4, k5, k6 = jax.random.split(key, 6)

    w_node = xavier_normal(k1, (num_node_type, H))
    w_in = xavier_normal(k2, (num_in_degree, H))
    w_out = xavier_normal(k3, (num_out_degree, H))

    x_ids = jax.random.randint(k4, (B, N, F), 0, num_node_type, dtype=jnp.int32)
    in_degree = jax.random.randint(k5, (B, N), 0, num_in_degree, dtype=jnp.int32)
    out_degree = jax.random.randint(k6, (B, N), 0, num_out_degree, dtype=jnp.int32)

    out = encoder_node_feature(x_ids, in_degree, out_degree,
                               w_node, w_in, w_out)
    out = jax.block_until_ready(out)
    assert out.shape == (B, N, H)

    # Reference with the same bf16 weight rounding the kernel uses (the only
    # numerics change vs the f32 torch module; accumulation stays f32).
    wn = w_node.astype(jnp.bfloat16).astype(jnp.float32)
    wi = w_in.astype(jnp.bfloat16).astype(jnp.float32)
    wo = w_out.astype(jnp.bfloat16).astype(jnp.float32)
    ref_bf16 = wn[x_ids].sum(axis=-2) + wi[in_degree] + wo[out_degree]
    assert jnp.allclose(out, ref_bf16, atol=1e-5, rtol=1e-5), \
        "mismatch vs bf16-weight reference"

    # Loose sanity check against the exact f32 module semantics.
    ref_f32 = w_node[x_ids].sum(axis=-2) + w_in[in_degree] + w_out[out_degree]
    assert jnp.allclose(out, ref_f32, atol=2e-2, rtol=2e-2), \
        "mismatch vs f32 reference beyond bf16 rounding"

    print("KERNEL_OK")
</pallas_src>

<mosaic_0001>
module attributes {stable_mosaic.version = 11 : i64} {
  func.func @_kernel(%arg0: i32, %arg1: memref<8x5xi32, #tpu.memory_space<vmem>>, %arg2: memref<128x128xbf16, #tpu.memory_space<vmem>>, %arg3: memref<8x128xf32, #tpu.memory_space<vmem>>) attributes {dimension_semantics = [#tpu.dimension_semantics<parallel>], iteration_bounds = array<i64: 2>, scalar_prefetch = 0 : i64, scratch_operands = 0 : i64, tpu.core_type = #tpu.core_type<tc>, window_params = [{transform_indices = @transform_0, window_bounds = array<i64: 8, 5>}, {pipeline_mode = #tpu.pipeline_mode<synchronous>, transform_indices = @transform_1, window_bounds = array<i64: 128, 128>}, {transform_indices = @transform_2, window_bounds = array<i64: 8, 128>}]} {
    %c0 = arith.constant 0 : index
    %c0_0 = arith.constant 0 : index
    %0 = vector.load %arg1[%c0, %c0_0] : memref<8x5xi32, #tpu.memory_space<vmem>>, vector<8x5xi32>
    %c0_i32 = arith.constant 0 : i32
    %1 = vector.broadcast %c0_i32 : i32 to vector<8x5xi32>
    %2 = arith.subi %0, %1 : vector<8x5xi32>
    %3 = tpu.iota {dimensions = array<i32: 1>} : vector<8x128xi32>
    %4 = vector.extract_strided_slice %2 {offsets = [0, 0], sizes = [8, 1], strides = [1, 1]} : vector<8x5xi32> to vector<8x1xi32>
    %5 = vector.broadcast %4 : vector<8x1xi32> to vector<8x128xi32>
    %6 = arith.cmpi eq, %5, %3 : vector<8x128xi32>
    %7 = arith.extui %6 : vector<8x128xi1> to vector<8x128xi32>
    %8 = vector.extract_strided_slice %2 {offsets = [0, 1], sizes = [8, 1], strides = [1, 1]} : vector<8x5xi32> to vector<8x1xi32>
    %9 = vector.broadcast %8 : vector<8x1xi32> to vector<8x128xi32>
    %10 = arith.cmpi eq, %9, %3 : vector<8x128xi32>
    %11 = arith.extui %10 : vector<8x128xi1> to vector<8x128xi32>
    %12 = arith.addi %7, %11 : vector<8x128xi32>
    %13 = vector.extract_strided_slice %2 {offsets = [0, 2], sizes = [8, 1], strides = [1, 1]} : vector<8x5xi32> to vector<8x1xi32>
    %14 = vector.broadcast %13 : vector<8x1xi32> to vector<8x128xi32>
    %15 = arith.cmpi eq, %14, %3 : vector<8x128xi32>
    %16 = arith.extui %15 : vector<8x128xi1> to vector<8x128xi32>
    %17 = arith.addi %12, %16 : vector<8x128xi32>
    %18 = vector.extract_strided_slice %2 {offsets = [0, 3], sizes = [8, 1], strides = [1, 1]} : vector<8x5xi32> to vector<8x1xi32>
    %19 = vector.broadcast %18 : vector<8x1xi32> to vector<8x128xi32>
    %20 = arith.cmpi eq, %19, %3 : vector<8x128xi32>
    %21 = arith.extui %20 : vector<8x128xi1> to vector<8x128xi32>
    %22 = arith.addi %17, %21 : vector<8x128xi32>
    %23 = vector.extract_strided_slice %2 {offsets = [0, 4], sizes = [8, 1], strides = [1, 1]} : vector<8x5xi32> to vector<8x1xi32>
    %24 = vector.broadcast %23 : vector<8x1xi32> to vector<8x128xi32>
    %25 = arith.cmpi eq, %24, %3 : vector<8x128xi32>
    %26 = arith.extui %25 : vector<8x128xi1> to vector<8x128xi32>
    %27 = arith.addi %22, %26 : vector<8x128xi32>
    %28 = arith.sitofp %27 : vector<8x128xi32> to vector<8x128xbf16>
    %c0_1 = arith.constant 0 : index
    %c0_2 = arith.constant 0 : index
    %29 = vector.load %arg2[%c0_1, %c0_2] : memref<128x128xbf16, #tpu.memory_space<vmem>>, vector<128x128xbf16>
    %cst = arith.constant dense<0.000000e+00> : vector<8x128xf32>
    %30 = tpu.matmul %28, %29, %cst {dimension_numbers = #tpu.dot_dimension_numbers<[1], [0], [0], [1], [0, 0, 1, 1], [], []>} : vector<8x128xbf16>, vector<128x128xbf16>, vector<8x128xf32> -> vector<8x128xf32>
    %c0_3 = arith.constant 0 : index
    %c0_4 = arith.constant 0 : index
    %31 = vector.load %arg3[%c0_3, %c0_4] : memref<8x128xf32, #tpu.memory_space<vmem>>, vector<8x128xf32>
    tpu.vector_store %arg3[%c0_3, %c0_4], %30 {strides = array<i32>} : memref<8x128xf32, #tpu.memory_space<vmem>>, vector<8x128xf32>,
    return
  }
  func.func @transform_0(%arg0: i32) -> (i32, i32) {
    %c0_i32 = arith.constant 0 : i32
    %c0_i32_0 = arith.constant 0 : i32
    return %arg0, %c0_i32 : i32, i32
  }
  func.func @transform_1(%arg0: i32) -> (i32, i32) {
    %c0_i32 = arith.constant 0 : i32
    %c0_i32_0 = arith.constant 0 : i32
    %c0_i32_1 = arith.constant 0 : i32
    return %c0_i32, %c0_i32_0 : i32, i32
  }
  func.func @transform_2(%arg0: i32) -> (i32, i32) {
    %c0_i32 = arith.constant 0 : i32
    %c0_i32_0 = arith.constant 0 : i32
    return %arg0, %c0_i32 : i32, i32
  }
}

</mosaic_0001>

<llo_original>
// kernel: tpu_custom_call.1
$region0: #{tpu_custom_call.1}
  #allocation0 [shape = 'u32[]', space=smem, size = 0x4, offset = 0x4, fixed_abs, tag = 'smem constant byte address 0x4 - core index']
  #allocation1 [shape = 'u32[144,128]{1,0:T(1,128)}', space=vmem, size = 0x12000, scoped, tag = 'internal scratch']
  %s0 = inlined_call_operand.vmem [shape: s32[16,5], index: 0, kind: input, shape index: {}]
  %s1 = inlined_call_operand.hbm [shape: bf16[128,128], index: 1, kind: input, shape index: {}]
  %s2 = inlined_call_operand.hbm [shape: f32[16,128], index: 2, kind: output, shape index: {}]
  %s3 = sld [smem:[#allocation0]]
  $region45: #{tpu_custom_call.1} parent=0
    _
  %s5 = ssub.s32 1, %s3
  %s6 = scalar_select 0, %s5, %s3
  $region1: #{tpu_custom_call.1} parent=0
    #allocation2 [shape = 'u8[32768]{0}', space=vmem, size = 0x8000, scoped, tag = 'input window, operand 1, single buffered']
    #allocation3 [shape = 's32[2]{0}', space=sflag, size = 0x8, scoped, tag = 'scoped memory for tpu_custom_call.1']
    #allocation4 [shape = 's32[2]{0}', space=sflag, size = 0x8, scoped, tag = 'scoped memory for tpu_custom_call.1']
    #allocation5 [shape = 'u8[8192]{0}', space=vmem, size = 0x2000, scoped, tag = 'output window, operand 0']
    %7 = vsyncpa [#allocation3], 0
    %8 = vsyncpa [#allocation4], 0
    %s9 = scalar_lea.sflag [#allocation4], 1
    %10 = vsyncpa %s9, 0
    loop: start=0, step=1, limit=4
    $region2: #{tpu_custom_call.1} parent=1 // loop_pre_header
      _
    $region3: #{tpu_custom_call.1} parent=1 // loop_header
      %s12 = sphi 0, %s16
      %p13 = scmp.ge.s32.totalorder %s12, 4
      %s22 = sphi 0, %s24
      %s25 = sphi 0, %s22
      %s26 = sphi 0, %s25
      %s42 = sphi 0, %s26
      %s46 = sphi 0, %s46
      %s48 = sphi 0, %s46
      %s49 = sphi 0, %s48
      %s63 = sphi 0, %s49
      %s69 = sphi 0, %s71
      %s72 = sphi 0, %s69
      %s73 = sphi 0, %s72
      %s89 = sphi 0, %s73
    $region4: #{tpu_custom_call.1} parent=1 // loop_header_branch
      %15 = sbr.rel (%p13) target = $region8
    $region5: #{tpu_custom_call.1} parent=1 // loop_body
      %s17 = ssub.s32 %s12, 1
      %s18 = ssub.s32 %s12, 2
      %s19 = sadd.s32 %s12, 1
      %s20 = ssub.s32 %s12, %s19
      %p21 = scmp.eq.s32.totalorder %s20, 0
      %s23 = sadd.s32 %s22, 1
      %s24 = scalar_select %p21, %s22, %s23
      %p27 = pneg %p21
      %p28 = scmp.eq.s32.totalorder %s12, 1
      %p29 = por %p27, %p28
      %p30 = scmp.ne.s32.totalorder %s22, %s25
      %p31 = scmp.eq.s32.totalorder %s12, 0
      %p32 = por %p30, %p31
      %p33 = scmp.ne.s32.totalorder %s22, %s25
      %p34 = scmp.eq.s32.totalorder %s17, 1
      %p35 = por %p33, %p34
      %p36 = scmp.ne.s32.totalorder %s25, %s26
      %p37 = scmp.eq.s32.totalorder %s17, 0
      %p38 = por %p36, %p37
      %p39 = scmp.ne.s32.totalorder %s25, %s26
      %p40 = scmp.eq.s32.totalorder %s18, 1
      %p41 = por %p39, %p40
      %p43 = scmp.ne.s32.totalorder %s26, %s42
      %p44 = scmp.eq.s32.totalorder %s18, 0
      %p45 = por %p43, %p44
      %s47 = sadd.s32 %s46, 1
      %p50 = scmp.eq.s32.totalorder %s12, 1
      %p51 = scmp.ne.s32.totalorder %s46, %s48
      %p52 = scmp.eq.s32.totalorder %s12, 0
      %p53 = por %p51, %p52
      %p54 = scmp.ne.s32.totalorder %s46, %s48
      %p55 = scmp.eq.s32.totalorder %s17, 1
      %p56 = por %p54, %p55
      %p57 = scmp.ne.s32.totalorder %s48, %s49
      %p58 = scmp.eq.s32.totalorder %s17, 0
      %p59 = por %p57, %p58
      %p60 = scmp.ne.s32.totalorder %s48, %s49
      %p61 = scmp.eq.s32.totalorder %s18, 1
      %p62 = por %p60, %p61
      %p64 = scmp.ne.s32.totalorder %s49, %s63
      %p65 = scmp.eq.s32.totalorder %s18, 0
      %p66 = por %p64, %p65
      %s67 = ssub.s32 %s12, %s19
      %p68 = scmp.eq.s32.totalorder %s67, 0
      %s70 = sadd.s32 %s69, 1
      %s71 = scalar_select %p68, %s69, %s70
      %p74 = pneg %p68
      %p75 = scmp.eq.s32.totalorder %s12, 1
      %p76 = por %p74, %p75
      %p77 = scmp.ne.s32.totalorder %s69, %s72
      %p78 = scmp.eq.s32.totalorder %s12, 0
      %p79 = por %p77, %p78
      %p80 = scmp.ne.s32.totalorder %s69, %s72
      %p81 = scmp.eq.s32.totalorder %s17, 1
      %p82 = por %p80, %p81
      %p83 = scmp.ne.s32.totalorder %s72, %s73
      %p84 = scmp.eq.s32.totalorder %s17, 0
      %p85 = por %p83, %p84
      %p86 = scmp.ne.s32.totalorder %s72, %s73
      %p87 = scmp.eq.s32.totalorder %s18, 1
      %p88 = por %p86, %p87
      %p90 = scmp.ne.s32.totalorder %s73, %s89
      %p91 = scmp.eq.s32.totalorder %s18, 0
      %p92 = por %p90, %p91
      %p93 = scmp.le.s32.totalorder 1, %s12
      %p94 = scmp.lt.s32.totalorder %s12, 3
      %p95 = pnand %p93, %p94
      %p96 = pneg %p95
      // Predicated region
      $region9: #{tpu_custom_call.1} parent=5 // pred_check
        _
      $region10: #{tpu_custom_call.1} parent=5 // pred_check_branch
        %98 = sbr.rel (%p95) target = $region12
      $region11: #{tpu_custom_call.1} parent=5 // pred_region
        %s99 = ssub.s32 %s12, 1
        // Predicated region
        $region13: #{tpu_custom_call.1} parent=11 // pred_check
          %p100 = pneg %p59
        $region14: #{tpu_custom_call.1} parent=11 // pred_check_branch
          %102 = sbr.rel (%p100) target = $region16
        $region15: #{tpu_custom_call.1} parent=11 // pred_region
          %s104 = ssub.s32 1024, 1024
          %105 = vsyncadd [#allocation3], %s104
          %s106 = sshll.u32 [#allocation2], 4
          %s107 = int_to_ptr.vmem [resolvable:$true] %s106
          %112 = dma.hbm_to_vmem [thread:$0]  %s1, 1024, %s107, [#allocation3], 64, 64, 4
        $region16: #{tpu_custom_call.1} parent=11 // pred_fallthru
          _
      $region12: #{tpu_custom_call.1} parent=5 // pred_fallthru
        _
      %p113 = scmp.lt.s32.totalorder %s12, 2
      // Predicated region
      $region17: #{tpu_custom_call.1} parent=5 // pred_check
        %p114 = pneg %p113
      $region18: #{tpu_custom_call.1} parent=5 // pred_check_branch
        %116 = sbr.rel (%p114) target = $region20
      $region19: #{tpu_custom_call.1} parent=5 // pred_region
        // Predicated region
        $region21: #{tpu_custom_call.1} parent=19 // pred_check
          %p117 = pneg %p32
        $region22: #{tpu_custom_call.1} parent=19 // pred_check_branch
          %119 = sbr.rel (%p117) target = $region24
        $region23: #{tpu_custom_call.1} parent=19 // pred_region
          %p120 = scmp.lt.s32.totalorder %s12, 1
          %s121 = scalar_select %p120, %s12, 1
          %s122 = smul.addr %s121, 8
          %s123 = scalar_lea.vmem %s0, %s122
        $region24: #{tpu_custom_call.1} parent=19 // pred_fallthru
          _
      $region20: #{tpu_custom_call.1} parent=5 // pred_fallthru
        _
      %p124 = scmp.le.s32.totalorder 1, %s12
      %p125 = scmp.lt.s32.totalorder %s12, 3
      %p126 = pnand %p124, %p125
      %p127 = pneg %p126
      // Predicated region
      $region25: #{tpu_custom_call.1} parent=5 // pred_check
        _
      $region26: #{tpu_custom_call.1} parent=5 // pred_check_branch
        %129 = sbr.rel (%p126) target = $region28
      $region27: #{tpu_custom_call.1} parent=5 // pred_region
        %s130 = ssub.s32 %s12, 1
        // Predicated region
        $region29: #{tpu_custom_call.1} parent=27 // pred_check
          %p131 = pneg %p59
        $region30: #{tpu_custom_call.1} parent=27 // pred_check_branch
          %133 = sbr.rel (%p131) target = $region32
        $region31: #{tpu_custom_call.1} parent=27 // pred_region
          %134 = dma.done [#allocation3], 1024
        $region32: #{tpu_custom_call.1} parent=27 // pred_fallthru
          _
        %p135 = scmp.lt.s32.totalorder %s17, 1
        %s136 = scalar_select %p135, %s17, 1
        %s137 = smul.addr %s136, 8
        %s138 = scalar_lea.vmem %s0, %s137
        %p139 = pneg %p38
        %p140 = pneg %p35
        %p141 = pneg %p59
        %p142 = pneg %p56
        %p143 = pneg %p85
        %p144 = pneg %p82
        %s145 = sand.u32 %s72, 1
        %s146 = scalar_lea.sflag [#allocation4], %s145
        %s147 = sand.u32 %s72, 1
        %s148 = smul.addr %s147, 8
        %s149 = scalar_lea.vmem [#allocation5], %s148
        %p150 = scmp.lt.s32.totalorder %s17, 1
        %s151 = scalar_select %p150, %s17, 1
        %s152 = smul.addr %s151, 8
        %s153 = scalar_lea.vmem %s0, %s152
        %v155 = vld [vmem:[%s153] sm:$0xff]
        %v156 = vlaneseq
        %v157 = vand.u32 %v156, 127
        %158 = vset.pattern.permute.xlu0 0
        %159 = vperm.xlu0 %158, %v155
        %v160 = vpop.permute.xlu0 %159
        %vm161 = vcmp.eq.s32.totalorder %v160, %v157
        %v162 = vsel %vm161, 1, 0
        %163 = vset.pattern.permute.xlu0 1
        %164 = vperm.xlu0 %163, %v155
        %v165 = vpop.permute.xlu0 %164
        %vm166 = vcmp.eq.s32.totalorder %v165, %v157
        %v167 = vsel %vm166, 1, 0
        %v168 = vadd.s32 %v162, %v167
        %169 = vset.pattern.permute.xlu0 2
        %170 = vperm.xlu0 %169, %v155
        %v171 = vpop.permute.xlu0 %170
        %vm172 = vcmp.eq.s32.totalorder %v171, %v157
        %v173 = vsel %vm172, 1, 0
        %v174 = vadd.s32 %v168, %v173
        %175 = vset.pattern.permute.xlu0 3
        %176 = vperm.xlu0 %175, %v155
        %v177 = vpop.permute.xlu0 %176
        %vm178 = vcmp.eq.s32.totalorder %v177, %v157
        %v179 = vsel %vm178, 1, 0
        %v180 = vadd.s32 %v174, %v179
        %181 = vset.pattern.permute.xlu0 4
        %182 = vperm.xlu0 %181, %v155
        %v183 = vpop.permute.xlu0 %182
        %vm184 = vcmp.eq.s32.totalorder %v183, %v157
        %v185 = vsel %vm184, 1, 0
        %v186 = vadd.s32 %v180, %v185
        %v187 = vcvt.s32.f32 %v186
        %v188 = vpack.c.bf16 %v187, %v187
        %v189 = vld [vmem:[#allocation2] sm:$0xf]
        %v190 = vld [vmem:[#allocation2 + $0x4] sm:$0xf]
        %v191 = vld [vmem:[#allocation2 + $0x8] sm:$0xf]
        %v192 = vld [vmem:[#allocation2 + $0xc] sm:$0xf]
        %v193 = vld [vmem:[#allocation2 + $0x10] sm:$0xf]
        %v194 = vld [vmem:[#allocation2 + $0x14] sm:$0xf]
        %v195 = vld [vmem:[#allocation2 + $0x18] sm:$0xf]
        %v196 = vld [vmem:[#allocation2 + $0x1c] sm:$0xf]
        %v197 = vld [vmem:[#allocation2 + $0x20] sm:$0xf]
        %v198 = vld [vmem:[#allocation2 + $0x24] sm:$0xf]
        %v199 = vld [vmem:[#allocation2 + $0x28] sm:$0xf]
        %v200 = vld [vmem:[#allocation2 + $0x2c] sm:$0xf]
        %v201 = vld [vmem:[#allocation2 + $0x30] sm:$0xf]
        %v202 = vld [vmem:[#allocation2 + $0x34] sm:$0xf]
        %v203 = vld [vmem:[#allocation2 + $0x38] sm:$0xf]
        %v204 = vld [vmem:[#allocation2 + $0x3c] sm:$0xf]
        %v221 = vunpack.c.l.b16 %v189
        %v222 = vunpack.c.l.b16 %v190
        %v223 = vunpack.c.l.b16 %v191
        %v224 = vunpack.c.l.b16 %v192
        %v225 = vunpack.c.l.b16 %v193
        %v226 = vunpack.c.l.b16 %v194
        %v227 = vunpack.c.l.b16 %v195
        %v228 = vunpack.c.l.b16 %v196
        %v229 = vunpack.c.l.b16 %v197
        %v230 = vunpack.c.l.b16 %v198
        %v231 = vunpack.c.l.b16 %v199
        %v232 = vunpack.c.l.b16 %v200
        %v233 = vunpack.c.l.b16 %v201
        %v234 = vunpack.c.l.b16 %v202
        %v235 = vunpack.c.l.b16 %v203
        %v236 = vunpack.c.l.b16 %v204
        %v237 = vpack.c.b16 %v222, %v221
        %v238 = vpack.c.b16 %v224, %v223
        %v239 = vpack.c.b16 %v226, %v225
        %v240 = vpack.c.b16 %v228, %v227
        %v241 = vpack.c.b16 %v230, %v229
        %v242 = vpack.c.b16 %v232, %v231
        %v243 = vpack.c.b16 %v234, %v233
        %v244 = vpack.c.b16 %v236, %v235
        %253 = vmatprep.subr.bf16.mxu0 0
        %254 = vmatpush1.bf16.msra.mxu0 %v244
        %255 = vmatprep.subr.bf16.mxu0 0
        %256 = vmatpush1.bf16.msra.mxu0 %v243
        %257 = vmatprep.subr.bf16.mxu0 0
        %258 = vmatpush1.bf16.msra.mxu0 %v242
        %259 = vmatprep.subr.bf16.mxu0 0
        %260 = vmatpush1.bf16.msra.mxu0 %v241
        %261 = vmatprep.subr.bf16.mxu0 0
        %262 = vmatpush1.bf16.msra.mxu0 %v240
        %263 = vmatprep.subr.bf16.mxu0 0
        %264 = vmatpush1.bf16.msra.mxu0 %v239
        %265 = vmatprep.subr.bf16.mxu0 0
        %266 = vmatpush1.bf16.msra.mxu0 %v238
        %267 = vmatprep.subr.bf16.mxu0 0
        %268 = vmatpush1.bf16.msra.mxu0 %v237
        %269 = vmatprep.subr.bf16.mxu0 0
        %270 = vmatpush2.bf16.msra.mxu0 0
        %271 = vmatprep.subr.bf16.mxu0 0
        %272 = vmatpush2.bf16.msra.mxu0 0
        %273 = vmatprep.subr.bf16.mxu0 0
        %274 = vmatpush2.bf16.msra.mxu0 0
        %275 = vmatprep.subr.bf16.mxu0 0
        %276 = vmatpush2.bf16.msra.mxu0 0
        %277 = vmatprep.subr.bf16.mxu0 0
        %278 = vmatpush2.bf16.msra.mxu0 0
        %279 = vmatprep.subr.bf16.mxu0 0
        %280 = vmatpush2.bf16.msra.mxu0 0
        %281 = vmatprep.subr.bf16.mxu0 0
        %282 = vmatpush2.bf16.msra.mxu0 0
        %283 = vmatprep.subr.bf16.mxu0 0
        %284 = vmatpush2.bf16.msra.mxu0 0
        %285 = vmatprep.mubr.bf16.mxu0 0
        %286 = vmatmul.mubr.bf16.gmra.mxu0 %v188
        %v287 = vpop.f32.mrf.mxu0
        %v288 = vadd.f32 0.0, %v287
        %v289 = vpop.f32.mrf.mxu0
        %v290 = vpop.f32.mrf.mxu0
        %v291 = vpop.f32.mrf.mxu0
        %292 = vdwg.mxu0
        %293 = vst [vmem:[%s149] sm:$0xff] %v288
        %s294 = sand.u32 %s72, 1
        %s295 = scalar_lea.sflag [#allocation4], %s294
        %s296 = sand.u32 %s72, 1
        %s297 = smul.addr %s296, 8
        %s298 = scalar_lea.vmem [#allocation5], %s297
        // Predicated region
        $region33: #{tpu_custom_call.1} parent=27 // pred_check
          %p299 = pneg %p82
        $region34: #{tpu_custom_call.1} parent=27 // pred_check_branch
          %301 = sbr.rel (%p299) target = $region36
        $region35: #{tpu_custom_call.1} parent=27 // pred_region
          %s303 = ssub.s32 128, 128
          %304 = vsyncadd %s295, %s303
          %s305 = smul.addr %s17, 128
          %s306 = scalar_lea.hbm %s2, %s305
          %s308 = sshll.u32 %s298, 4
          %s309 = int_to_ptr.vmem [resolvable:$true] %s308
          %311 = dma.vmem_to_hbm [thread:$0]  %s309, 128, %s306, %s295
        $region36: #{tpu_custom_call.1} parent=27 // pred_fallthru
          _
      $region28: #{tpu_custom_call.1} parent=5 // pred_fallthru
        _
      %p312 = scmp.le.s32.totalorder 2, %s12
      // Predicated region
      $region37: #{tpu_custom_call.1} parent=5 // pred_check
        %p313 = pneg %p312
      $region38: #{tpu_custom_call.1} parent=5 // pred_check_branch
        %315 = sbr.rel (%p313) target = $region40
      $region39: #{tpu_custom_call.1} parent=5 // pred_region
        %s316 = ssub.s32 %s12, 2
        // Predicated region
        $region41: #{tpu_custom_call.1} parent=39 // pred_check
          %p317 = pneg %p88
        $region42: #{tpu_custom_call.1} parent=39 // pred_check_branch
          %319 = sbr.rel (%p317) target = $region44
        $region43: #{tpu_custom_call.1} parent=39 // pred_region
          %s320 = sand.u32 %s73, 1
          %s321 = scalar_lea.sflag [#allocation4], %s320
          %s322 = sand.u32 %s73, 1
          %s323 = smul.addr %s322, 8
          %s324 = scalar_lea.vmem [#allocation5], %s323
          %325 = dma.done %s321, 128
        $region44: #{tpu_custom_call.1} parent=39 // pred_fallthru
          _
      $region40: #{tpu_custom_call.1} parent=5 // pred_fallthru
        _
    $region6: #{tpu_custom_call.1} parent=1 // loop_footer
      %s16 = sadd.s32 1, %s12
    $region7: #{tpu_custom_call.1} parent=1 // loop_footer_branch
      %11 = sbr.rel target = $region3
    $region8: #{tpu_custom_call.1} parent=1 // loop_exit
      _
    %326 = vsyncpa [#allocation3], 1
    %s327 = scalar_lea.sflag [#allocation3], 1
    %328 = vsyncpa %s327, 1
    %329 = vsyncpa [#allocation4], 1
    %s330 = scalar_lea.sflag [#allocation4], 1
    %331 = vsyncpa %s330, 1

</llo_original>
